<compile_context>
chip_gen: v7x
topology: tpu7x:2x2x1
jax: 0.10.0
libtpu: 0.0.40
codegen_flags: <defaults>
</compile_context>

<pallas_src>
import functools

import jax
import jax.numpy as jnp
from jax.experimental import pallas as pl
from jax.experimental.pallas import tpu as pltpu


def _round_up(v, m):
    return (v + m - 1) // m * m


def _pick_tile(aligned_dim, desired, align):
    """Largest multiple of `align` that divides `aligned_dim` and is <= desired."""
    t = max(align, min(desired, aligned_dim))
    t -= t % align
    while aligned_dim % t:
        t -= align
    return t


def _tile_config():
    """Generation-sized tiles + scoped-VMEM budget."""
    try:
        kind = jax.devices()[0].device_kind.lower()
    except Exception:  # pragma: no cover - defensive, keep kernel usable anywhere
        kind = ""
    if "v5" in kind:
        # ~240 flop/byte needed: 512x512 output tiles are enough on v5e.
        return 512, 512, 2048, 64 * 1024 * 1024
    if "v6" in kind:
        # ~650 flop/byte needed: big output tile, raised scoped-VMEM limit.
        return 1024, 2048, 2048, 96 * 1024 * 1024
    # v7x (and unknown): 64 MiB physical VMEM per TC -> keep scoped limit <= 48 MiB.
    return 512, 1024, 2048, 48 * 1024 * 1024


def _fc_kernel_streamed(x_ref, w_ref, b_ref, o_ref, *, use_activation):
    """grid=(i, j, k); x:(tm,tk) bf16, w:(tk,tn) bf16, b:(1,tn) f32, o:(tm,tn) f32."""
    k = pl.program_id(2)
    x = x_ref[...]
    if use_activation:
        # tanh in f32 (v5e EUP is f32-only); MXU operand cast back to bf16.
        x = jnp.tanh(x.astype(jnp.float32)).astype(jnp.bfloat16)
    contrib = jnp.dot(x, w_ref[...], preferred_element_type=jnp.float32)

    @pl.when(k == 0)
    def _init():
        o_ref[...] = contrib + b_ref[...]        # bias added exactly once

    @pl.when(k > 0)
    def _accum():
        o_ref[...] = o_ref[...] + contrib


def _fc_kernel_resident(x_ref, w_ref, b_ref, o_ref, *, use_activation, tk):
    """grid=(j, i, k); w_ref is the full (K, tn) column strip, resident over i,k."""
    k = pl.program_id(2)
    x = x_ref[...]
    if use_activation:
        x = jnp.tanh(x.astype(jnp.float32)).astype(jnp.bfloat16)
    k0 = pl.multiple_of(k * tk, 128)
    contrib = jnp.dot(x, w_ref[pl.ds(k0, tk), :],
                      preferred_element_type=jnp.float32)

    @pl.when(k == 0)
    def _init():
        o_ref[...] = contrib + b_ref[...]

    @pl.when(k > 0)
    def _accum():
        o_ref[...] = o_ref[...] + contrib


def fc_layer(x, w, b, *, use_activation=True, dropout_rate=0.0,
             tm=None, tn=None, tk=None, vmem_limit_bytes=None,
             w_resident_bytes=8 * 1024 * 1024):
    """Pallas equivalent of FCLayer.forward (eval mode).

    x: [B, D_in] f32; w: [D_in, D_out] f32 (transposed nn.Linear weight); b: [D_out].
    """
    # TODO(synk): dropout is identity here (rate=0.0 / eval mode); training-mode
    # dropout would need pltpu.prng_seed + pltpu.prng_random_bits in-kernel.
    del dropout_rate

    B, D_in = x.shape
    assert w.shape[0] == D_in
    D_out = w.shape[1]

    d_tm, d_tn, d_tk, d_vmem = _tile_config()
    tm = d_tm if tm is None else tm
    tn = d_tn if tn is None else tn
    tk = d_tk if tk is None else tk
    vmem_limit_bytes = d_vmem if vmem_limit_bytes is None else vmem_limit_bytes

    # Pad only to hardware alignment (8 sublanes / 128 lanes); tiles then divide
    # the aligned dims, capping padding waste at <8 rows / <128 lanes.
    M = _round_up(B, 8)
    K = _round_up(D_in, 128)
    N = _round_up(D_out, 128)
    tm = _pick_tile(M, tm, 8)
    tn = _pick_tile(N, tn, 128)
    tk = _pick_tile(K, tk, 128)
    gm, gn, gk = M // tm, N // tn, K // tk

    # bf16 activation stream (halves x HBM traffic); zero padding is inert
    # (tanh(0)=0 and padded weight rows/cols are 0) and sliced off at the end.
    x_p = jnp.pad(x, ((0, M - B), (0, K - D_in))).astype(jnp.bfloat16)
    # TODO(synk): weights are static in the PyTorch module -- in a real deployment
    # hoist this pad + bf16 cast out of the per-call path.
    w_p = jnp.pad(w, ((0, K - D_in), (0, N - D_out))).astype(jnp.bfloat16)
    b_p = jnp.pad(b, (0, N - D_out)).astype(jnp.float32).reshape(1, N)

    # Weight residency: keep a full (K, tn) column strip of W in VMEM (DMA'd once
    # per j) instead of re-streaming (tk, tn) blocks from HBM for every i.
    resident = (K * tn * 2) <= w_resident_bytes

    if resident:
        grid = (gn, gm, gk)          # j outermost -> W strip reused across i and k
        kernel = functools.partial(_fc_kernel_resident,
                                   use_activation=use_activation, tk=tk)
        in_specs = [
            pl.BlockSpec((tm, tk), lambda j, i, k: (i, k)),   # x (bf16)
            pl.BlockSpec((K, tn), lambda j, i, k: (0, j)),    # W strip (bf16), resident
            pl.BlockSpec((1, tn), lambda j, i, k: (0, j)),    # bias (f32)
        ]
        out_specs = pl.BlockSpec((tm, tn), lambda j, i, k: (i, j))
        w_hbm_bytes = K * N * 2                               # read once
    else:
        grid = (gm, gn, gk)
        kernel = functools.partial(_fc_kernel_streamed,
                                   use_activation=use_activation)
        in_specs = [
            pl.BlockSpec((tm, tk), lambda i, j, k: (i, k)),
            pl.BlockSpec((tk, tn), lambda i, j, k: (k, j)),
            pl.BlockSpec((1, tn), lambda i, j, k: (0, j)),
        ]
        out_specs = pl.BlockSpec((tm, tn), lambda i, j, k: (i, j))
        w_hbm_bytes = gm * K * N * 2                          # re-read per i tile

    cost = pl.CostEstimate(
        flops=2 * M * N * K,
        transcendentals=(M * K * gn) if use_activation else 0,
        bytes_accessed=gn * M * K * 2 + w_hbm_bytes + N * 4 + M * N * 4,
    )

    out = pl.pallas_call(
        kernel,
        out_shape=jax.ShapeDtypeStruct((M, N), jnp.float32),
        grid_spec=pltpu.PrefetchScalarGridSpec(
            num_scalar_prefetch=0,
            grid=grid,
            in_specs=in_specs,
            out_specs=out_specs,
        ),
        compiler_params=pltpu.CompilerParams(
            dimension_semantics=("parallel", "parallel", "arbitrary"),
            vmem_limit_bytes=vmem_limit_bytes,
        ),
        cost_estimate=cost,
    )(x_p, w_p, b_p)

    return out[:B, :D_out]


def fc_layer_ref(x, w, b, *, use_activation=True):
    """Pure-JAX reference with matching bf16 streams / f32 accumulation."""
    h = x.astype(jnp.bfloat16).astype(jnp.float32)
    if use_activation:
        h = jnp.tanh(h)
    y = jnp.dot(h.astype(jnp.bfloat16), w.astype(jnp.bfloat16),
                preferred_element_type=jnp.float32)
    return y + b


if __name__ == "__main__":
    key = jax.random.PRNGKey(0)
    k_x, k_w, k_b, k_x2, k_w2, k_b2 = jax.random.split(key, 6)

    # Case 1: default tiles, tanh path (small FCLayer: 32 -> 64).
    B, D_in, D_out = 8, 32, 64
    x = jax.random.normal(k_x, (B, D_in), dtype=jnp.float32)
    bound = 1.0 / jnp.sqrt(jnp.float32(D_in))
    w = jax.random.uniform(k_w, (D_in, D_out), minval=-bound, maxval=bound,
                           dtype=jnp.float32)
    b = jax.random.uniform(k_b, (D_out,), minval=-bound, maxval=bound,
                           dtype=jnp.float32)

    out = jax.block_until_ready(fc_layer(x, w, b, use_activation=True))
    ref = fc_layer_ref(x, w, b, use_activation=True)
    ref_f32 = jnp.tanh(x) @ w + b
    assert out.shape == (B, D_out)
    assert jnp.allclose(out, ref, atol=2e-2, rtol=2e-2)
    assert jnp.allclose(out, ref_f32, atol=5e-2, rtol=5e-2)

    # Case 2: no-activation path.
    out2 = jax.block_until_ready(fc_layer(x, w, b, use_activation=False))
    ref2 = fc_layer_ref(x, w, b, use_activation=False)
    assert jnp.allclose(out2, ref2, atol=2e-2, rtol=2e-2)

    # Case 3: explicit tiny tiles -> multi-block grid with K accumulation and the
    # resident-weight path exercised (Mi=2, Nj=3, Kk=2).
    B3, Din3, Dout3 = 32, 256, 384
    x3 = jax.random.normal(k_x2, (B3, Din3), dtype=jnp.float32)
    bound3 = 1.0 / jnp.sqrt(jnp.float32(Din3))
    w3 = jax.random.uniform(k_w2, (Din3, Dout3), minval=-bound3, maxval=bound3,
                            dtype=jnp.float32)
    b3 = jax.random.uniform(k_b2, (Dout3,), minval=-bound3, maxval=bound3,
                            dtype=jnp.float32)
    ref3 = fc_layer_ref(x3, w3, b3, use_activation=True)
    out3 = jax.block_until_ready(
        fc_layer(x3, w3, b3, use_activation=True, tm=16, tn=128, tk=128))
    assert jnp.allclose(out3, ref3, atol=2e-2, rtol=2e-2)

    # Case 4: same shapes, forcing the streamed-weight path (residency disabled).
    out4 = jax.block_until_ready(
        fc_layer(x3, w3, b3, use_activation=True, tm=16, tn=128, tk=128,
                 w_resident_bytes=0))
    assert jnp.allclose(out4, ref3, atol=2e-2, rtol=2e-2)

    print("KERNEL_OK")
</pallas_src>

<mosaic_0001>
module attributes {stable_mosaic.version = 11 : i64} {
  func.func @_fc_kernel_resident(%arg0: i32, %arg1: i32, %arg2: i32, %arg3: memref<8x128xbf16, #tpu.memory_space<vmem>>, %arg4: memref<128x128xbf16, #tpu.memory_space<vmem>>, %arg5: memref<1x128xf32, #tpu.memory_space<vmem>>, %arg6: memref<8x128xf32, #tpu.memory_space<vmem>>) attributes {dimension_semantics = [#tpu.dimension_semantics<parallel>, #tpu.dimension_semantics<parallel>, #tpu.dimension_semantics<arbitrary>], iteration_bounds = array<i64: 1, 1, 1>, scalar_prefetch = 0 : i64, scratch_operands = 0 : i64, tpu.core_type = #tpu.core_type<tc>, window_params = [{transform_indices = @transform_0, window_bounds = array<i64: 8, 128>}, {transform_indices = @transform_1, window_bounds = array<i64: 128, 128>}, {transform_indices = @transform_2, window_bounds = array<i64: 1, 128>}, {transform_indices = @transform_3, window_bounds = array<i64: 8, 128>}]} {
    %c0 = arith.constant 0 : index
    %c0_0 = arith.constant 0 : index
    %0 = vector.load %arg3[%c0, %c0_0] : memref<8x128xbf16, #tpu.memory_space<vmem>>, vector<8x128xbf16>
    %1 = arith.extf %0 : vector<8x128xbf16> to vector<8x128xf32>
    %2 = math.tanh %1 : vector<8x128xf32>
    %3 = arith.truncf %2 : vector<8x128xf32> to vector<8x128xbf16>
    %c128_i32 = arith.constant 128 : i32
    %4 = arith.muli %arg2, %c128_i32 : i32
    %5 = tpu.assume_multiple %4, 128 : i32
    %6 = arith.index_cast %5 : i32 to index
    %c0_1 = arith.constant 0 : index
    %7 = vector.load %arg4[%6, %c0_1] : memref<128x128xbf16, #tpu.memory_space<vmem>>, vector<128x128xbf16>
    %cst = arith.constant dense<0.000000e+00> : vector<8x128xf32>
    %8 = tpu.matmul %3, %7, %cst {dimension_numbers = #tpu.dot_dimension_numbers<[1], [0], [0], [1], [0, 0, 1, 1], [], []>} : vector<8x128xbf16>, vector<128x128xbf16>, vector<8x128xf32> -> vector<8x128xf32>
    %c0_i32 = arith.constant 0 : i32
    %9 = arith.cmpi eq, %arg2, %c0_i32 : i32
    %10 = arith.extui %9 : i1 to i32
    %c0_i32_2 = arith.constant 0 : i32
    %11 = arith.cmpi ne, %10, %c0_i32_2 : i32
    scf.if %11 {
      %c0_5 = arith.constant 0 : index
      %c0_6 = arith.constant 0 : index
      %15 = vector.load %arg5[%c0_5, %c0_6] : memref<1x128xf32, #tpu.memory_space<vmem>>, vector<1x128xf32>
      %16 = vector.broadcast %15 : vector<1x128xf32> to vector<8x128xf32>
      %17 = arith.addf %8, %16 : vector<8x128xf32>
      %c0_7 = arith.constant 0 : index
      %c0_8 = arith.constant 0 : index
      %18 = vector.load %arg6[%c0_7, %c0_8] : memref<8x128xf32, #tpu.memory_space<vmem>>, vector<8x128xf32>
      tpu.vector_store %arg6[%c0_7, %c0_8], %17 {strides = array<i32>} : memref<8x128xf32, #tpu.memory_space<vmem>>, vector<8x128xf32>,
    } else {
    }
    %c0_i32_3 = arith.constant 0 : i32
    %12 = arith.cmpi sgt, %arg2, %c0_i32_3 : i32
    %13 = arith.extui %12 : i1 to i32
    %c0_i32_4 = arith.constant 0 : i32
    %14 = arith.cmpi ne, %13, %c0_i32_4 : i32
    scf.if %14 {
      %c0_5 = arith.constant 0 : index
      %c0_6 = arith.constant 0 : index
      %15 = vector.load %arg6[%c0_5, %c0_6] : memref<8x128xf32, #tpu.memory_space<vmem>>, vector<8x128xf32>
      %16 = arith.addf %15, %8 : vector<8x128xf32>
      %c0_7 = arith.constant 0 : index
      %c0_8 = arith.constant 0 : index
      %17 = vector.load %arg6[%c0_7, %c0_8] : memref<8x128xf32, #tpu.memory_space<vmem>>, vector<8x128xf32>
      tpu.vector_store %arg6[%c0_7, %c0_8], %16 {strides = array<i32>} : memref<8x128xf32, #tpu.memory_space<vmem>>, vector<8x128xf32>,
    } else {
    }
    return
  }
  func.func @transform_0(%arg0: i32, %arg1: i32, %arg2: i32) -> (i32, i32) {
    %c0_i32 = arith.constant 0 : i32
    return %arg1, %arg2 : i32, i32
  }
  func.func @transform_1(%arg0: i32, %arg1: i32, %arg2: i32) -> (i32, i32) {
    %c0_i32 = arith.constant 0 : i32
    %c0_i32_0 = arith.constant 0 : i32
    return %c0_i32, %arg0 : i32, i32
  }
  func.func @transform_2(%arg0: i32, %arg1: i32, %arg2: i32) -> (i32, i32) {
    %c0_i32 = arith.constant 0 : i32
    %c0_i32_0 = arith.constant 0 : i32
    return %c0_i32, %arg0 : i32, i32
  }
  func.func @transform_3(%arg0: i32, %arg1: i32, %arg2: i32) -> (i32, i32) {
    %c0_i32 = arith.constant 0 : i32
    return %arg1, %arg0 : i32, i32
  }
}

</mosaic_0001>

<llo_original>
// kernel: tpu_custom_call.1
$region0: #{tpu_custom_call.1}
  #allocation0 [shape = 'u32[]', space=smem, size = 0x4, offset = 0x4, fixed_abs, tag = 'smem constant byte address 0x4 - core index']
  #allocation1 [shape = 'u32[144,128]{1,0:T(1,128)}', space=vmem, size = 0x12000, scoped, tag = 'internal scratch']
  %s0 = inlined_call_operand.hbm [shape: bf16[8,128], index: 0, kind: input, shape index: {}]
  %s1 = inlined_call_operand.hbm [shape: bf16[128,128], index: 1, kind: input, shape index: {}]
  %s2 = inlined_call_operand.vmem [shape: f32[1,128], index: 2, kind: input, shape index: {}]
  %s3 = inlined_call_operand.hbm [shape: f32[8,128], index: 3, kind: output, shape index: {}]
  %s4 = sld [smem:[#allocation0]]
  $region38: #{tpu_custom_call.1} parent=0
    _
  %s6 = ssub.s32 1, %s4
  %s7 = scalar_select 0, %s6, %s4
  $region1: #{tpu_custom_call.1} parent=0
    #allocation2 [shape = 'u8[2048]{0}', space=vmem, size = 0x800, scoped, tag = 'input window, operand 0, single buffered']
    #allocation3 [shape = 's32[1]{0}', space=sflag, size = 0x4, scoped, tag = 'scoped memory for tpu_custom_call.1']
    #allocation4 [shape = 's32[1]{0}', space=sflag, size = 0x4, scoped, tag = 'scoped memory for tpu_custom_call.1']
    #allocation5 [shape = 'u8[32768]{0}', space=vmem, size = 0x8000, scoped, tag = 'input window, operand 1, single buffered']
    #allocation6 [shape = 's32[1]{0}', space=sflag, size = 0x4, scoped, tag = 'scoped memory for tpu_custom_call.1']
    #allocation7 [shape = 'u8[4096]{0}', space=vmem, size = 0x1000, scoped, tag = 'output window, operand 0, single buffered']
    %8 = vsyncpa [#allocation3], 0
    %9 = vsyncpa [#allocation6], 0
    %10 = vsyncpa [#allocation4], 0
    // Predicated region
    $region2: #{tpu_custom_call.1} parent=1 // pred_check
      _
    $region3: #{tpu_custom_call.1} parent=1 // pred_check_branch
      %12 = sbr.rel (0) target = $region5
    $region4: #{tpu_custom_call.1} parent=1 // pred_region
      %s14 = ssub.s32 64, 64
      %15 = vsyncadd [#allocation3], %s14
      %s17 = sshll.u32 [#allocation2], 4
      %s18 = int_to_ptr.vmem [resolvable:$true] %s17
      %20 = dma.hbm_to_vmem [thread:$0]  %s0, 64, %s18, [#allocation3]
    $region5: #{tpu_custom_call.1} parent=1 // pred_fallthru
      _
    // Predicated region
    $region6: #{tpu_custom_call.1} parent=1 // pred_check
      _
    $region7: #{tpu_custom_call.1} parent=1 // pred_check_branch
      %22 = sbr.rel (0) target = $region9
    $region8: #{tpu_custom_call.1} parent=1 // pred_region
      %s24 = ssub.s32 1024, 1024
      %25 = vsyncadd [#allocation6], %s24
      %s26 = sshll.u32 [#allocation5], 4
      %s27 = int_to_ptr.vmem [resolvable:$true] %s26
      %32 = dma.hbm_to_vmem [thread:$0]  %s1, 1024, %s27, [#allocation6], 64, 64, 4
    $region9: #{tpu_custom_call.1} parent=1 // pred_fallthru
      _
    // Predicated region
    $region10: #{tpu_custom_call.1} parent=1 // pred_check
      _
    $region11: #{tpu_custom_call.1} parent=1 // pred_check_branch
      %34 = sbr.rel (0) target = $region13
    $region12: #{tpu_custom_call.1} parent=1 // pred_region
      _
    $region13: #{tpu_custom_call.1} parent=1 // pred_fallthru
      _
    // Predicated region
    $region14: #{tpu_custom_call.1} parent=1 // pred_check
      _
    $region15: #{tpu_custom_call.1} parent=1 // pred_check_branch
      %36 = sbr.rel (0) target = $region17
    $region16: #{tpu_custom_call.1} parent=1 // pred_region
      %37 = dma.done [#allocation3], 64
    $region17: #{tpu_custom_call.1} parent=1 // pred_fallthru
      _
    // Predicated region
    $region18: #{tpu_custom_call.1} parent=1 // pred_check
      _
    $region19: #{tpu_custom_call.1} parent=1 // pred_check_branch
      %39 = sbr.rel (0) target = $region21
    $region20: #{tpu_custom_call.1} parent=1 // pred_region
      %40 = dma.done [#allocation6], 1024
    $region21: #{tpu_custom_call.1} parent=1 // pred_fallthru
      _
    %v42 = vld [vmem:[#allocation2] sm:$0xf]
    %v43 = vunpack.c.l.bf16 %v42
    %v44 = vtanh.pop %v43
    %v45 = vpack.c.bf16 %v44, %v44
    %s46 = smul.u32 0, 128
    %s47 = sshra.s32 %s46, 3
    %s48 = sand.u32 %s46, 7
    %s49 = smul.addr %s47, 4
    %s50 = scalar_lea.vmem [#allocation5], %s49
    %v51 = vld [vmem:[%s50] sm:$0xf]
    %v52 = vld [vmem:[%s50 + $0x4] sm:$0xf]
    %v53 = vld [vmem:[%s50 + $0x8] sm:$0xf]
    %v54 = vld [vmem:[%s50 + $0xc] sm:$0xf]
    %v55 = vld [vmem:[%s50 + $0x10] sm:$0xf]
    %v56 = vld [vmem:[%s50 + $0x14] sm:$0xf]
    %v57 = vld [vmem:[%s50 + $0x18] sm:$0xf]
    %v58 = vld [vmem:[%s50 + $0x1c] sm:$0xf]
    %v59 = vld [vmem:[%s50 + $0x20] sm:$0xf]
    %v60 = vld [vmem:[%s50 + $0x24] sm:$0xf]
    %v61 = vld [vmem:[%s50 + $0x28] sm:$0xf]
    %v62 = vld [vmem:[%s50 + $0x2c] sm:$0xf]
    %v63 = vld [vmem:[%s50 + $0x30] sm:$0xf]
    %v64 = vld [vmem:[%s50 + $0x34] sm:$0xf]
    %v65 = vld [vmem:[%s50 + $0x38] sm:$0xf]
    %v66 = vld [vmem:[%s50 + $0x3c] sm:$0xf]
    %v83 = vunpack.c.l.b16 %v51
    %v84 = vunpack.c.l.b16 %v52
    %v85 = vunpack.c.l.b16 %v53
    %v86 = vunpack.c.l.b16 %v54
    %v87 = vunpack.c.l.b16 %v55
    %v88 = vunpack.c.l.b16 %v56
    %v89 = vunpack.c.l.b16 %v57
    %v90 = vunpack.c.l.b16 %v58
    %v91 = vunpack.c.l.b16 %v59
    %v92 = vunpack.c.l.b16 %v60
    %v93 = vunpack.c.l.b16 %v61
    %v94 = vunpack.c.l.b16 %v62
    %v95 = vunpack.c.l.b16 %v63
    %v96 = vunpack.c.l.b16 %v64
    %v97 = vunpack.c.l.b16 %v65
    %v98 = vunpack.c.l.b16 %v66
    %v99 = vpack.c.b16 %v84, %v83
    %v100 = vpack.c.b16 %v86, %v85
    %v101 = vpack.c.b16 %v88, %v87
    %v102 = vpack.c.b16 %v90, %v89
    %v103 = vpack.c.b16 %v92, %v91
    %v104 = vpack.c.b16 %v94, %v93
    %v105 = vpack.c.b16 %v96, %v95
    %v106 = vpack.c.b16 %v98, %v97
    %115 = vmatprep.subr.bf16.mxu0 0
    %116 = vmatpush1.bf16.msra.mxu0 %v99
    %117 = vmatprep.subr.bf16.mxu0 0
    %118 = vmatpush1.bf16.msra.mxu0 %v100
    %119 = vmatprep.subr.bf16.mxu0 0
    %120 = vmatpush1.bf16.msra.mxu0 %v101
    %121 = vmatprep.subr.bf16.mxu0 0
    %122 = vmatpush1.bf16.msra.mxu0 %v102
    %123 = vmatprep.subr.bf16.mxu0 0
    %124 = vmatpush1.bf16.msra.mxu0 %v103
    %125 = vmatprep.subr.bf16.mxu0 0
    %126 = vmatpush1.bf16.msra.mxu0 %v104
    %127 = vmatprep.subr.bf16.mxu0 0
    %128 = vmatpush1.bf16.msra.mxu0 %v105
    %129 = vmatprep.subr.bf16.mxu0 0
    %130 = vmatpush1.bf16.msra.mxu0 %v106
    %131 = vmatprep.subr.bf16.mxu0 0
    %132 = vmatpush1.bf16.msra.mxu0 0
    %133 = vmatprep.subr.bf16.mxu0 0
    %134 = vmatpush1.bf16.msra.mxu0 0
    %135 = vmatprep.subr.bf16.mxu0 0
    %136 = vmatpush1.bf16.msra.mxu0 0
    %137 = vmatprep.subr.bf16.mxu0 0
    %138 = vmatpush1.bf16.msra.mxu0 0
    %139 = vmatprep.subr.bf16.mxu0 0
    %140 = vmatpush1.bf16.msra.mxu0 0
    %141 = vmatprep.subr.bf16.mxu0 0
    %142 = vmatpush1.bf16.msra.mxu0 0
    %143 = vmatprep.subr.bf16.mxu0 0
    %144 = vmatpush1.bf16.msra.mxu0 0
    %145 = vmatprep.subr.bf16.mxu0 0
    %146 = vmatpush1.bf16.msra.mxu0 0
    %147 = vmatprep.mubr.bf16.mxu0 0
    %148 = vmatmul.mubr.bf16.gmra.mrb[0].mxu0 %v45
    %v149 = vpop.f32.mrb[0].mxu0
    %v150 = vadd.f32 0.0, %v149
    %v151 = vpop.f32.mrb[0].mxu0
    %v152 = vpop.f32.mrb[0].mxu0
    %v153 = vpop.f32.mrb[0].mxu0
    %154 = vdwg.mxu0
    %p155 = scmp.eq.s32.totalorder 0, 0
    // Predicated region
    $region22: #{tpu_custom_call.1} parent=1 // pred_check
      %p156 = pneg %p155
    $region23: #{tpu_custom_call.1} parent=1 // pred_check_branch
      %158 = sbr.rel (%p156) target = $region25
    $region24: #{tpu_custom_call.1} parent=1 // pred_region
      %v159 = vld [vmem:[%s2] sm:$0x1]
      %v161 = vlaneseq
      %v162 = vshrl.u32 %v161, 7
      %v163 = vsub.s32 0, %v162
      %v164 = vrot.slane %v159, %v163
      %v166 = vadd.f32 %v150, %v164
      %167 = vst [vmem:[#allocation7] sm:$0xff] %v166
    $region25: #{tpu_custom_call.1} parent=1 // pred_fallthru
      _
    %p168 = scmp.gt.s32.totalorder 0, 0
    // Predicated region
    $region26: #{tpu_custom_call.1} parent=1 // pred_check
      %p169 = pneg %p168
    $region27: #{tpu_custom_call.1} parent=1 // pred_check_branch
      %171 = sbr.rel (%p169) target = $region29
    $region28: #{tpu_custom_call.1} parent=1 // pred_region
      %v172 = vld [vmem:[#allocation7] sm:$0xff]
      %v173 = vadd.f32 %v172, %v150
      %174 = vst [vmem:[#allocation7] sm:$0xff] %v173
    $region29: #{tpu_custom_call.1} parent=1 // pred_fallthru
      _
    // Predicated region
    $region30: #{tpu_custom_call.1} parent=1 // pred_check
      _
    $region31: #{tpu_custom_call.1} parent=1 // pred_check_branch
      %176 = sbr.rel (0) target = $region33
    $region32: #{tpu_custom_call.1} parent=1 // pred_region
      %s178 = ssub.s32 128, 128
      %179 = vsyncadd [#allocation4], %s178
      %s181 = sshll.u32 [#allocation7], 4
      %s182 = int_to_ptr.vmem [resolvable:$true] %s181
      %184 = dma.vmem_to_hbm [thread:$0]  %s182, 128, %s3, [#allocation4]
    $region33: #{tpu_custom_call.1} parent=1 // pred_fallthru
      _
    // Predicated region
    $region34: #{tpu_custom_call.1} parent=1 // pred_check
      _
    $region35: #{tpu_custom_call.1} parent=1 // pred_check_branch
      %186 = sbr.rel (0) target = $region37
    $region36: #{tpu_custom_call.1} parent=1 // pred_region
      %187 = dma.done [#allocation4], 128
    $region37: #{tpu_custom_call.1} parent=1 // pred_fallthru
      _
    %188 = vsyncpa [#allocation3], 1
    %189 = vsyncpa [#allocation6], 1
    %190 = vsyncpa [#allocation4], 1

</llo_original>
